<compile_context>
chip_gen: v7x
topology: tpu7x:2x2x1
jax: 0.10.0
libtpu: 0.0.40
codegen_flags: <defaults>
</compile_context>

<pallas_src>
import functools

import jax
import jax.numpy as jnp
from jax.experimental import pallas as pl
from jax.experimental.pallas import tpu as pltpu


def _round_up(x, m):
    return (x + m - 1) // m * m


def _simam_rows_kernel(x_ref, o_ref, *, n, e_lambda):
    # x_ref / o_ref: (br, HW) tile in VMEM; spatial dims on the lane axis.
    x = x_ref[...].astype(jnp.float32)

    mu = jnp.mean(x, axis=-1, keepdims=True)          # per-row mean over H*W
    d = x - mu
    d2 = d * d                                        # x_minus_mu_square
    s = jnp.sum(d2, axis=-1, keepdims=True)           # per-row sum over H*W

    denom = 4.0 * (s * (1.0 / n) + e_lambda)          # (br, 1)
    inv = pl.reciprocal(denom)                        # per-row reciprocal (EUP)
    y = d2 * inv + 0.5

    o_ref[...] = (x * jax.nn.sigmoid(y)).astype(o_ref.dtype)


def _simam_cols_kernel(x_ref, o_ref, *, n, e_lambda):
    # x_ref / o_ref: (HW, bc) tile in VMEM; spatial dims on the sublane axis,
    # channels on the (lane-dense) last axis.
    x = x_ref[...].astype(jnp.float32)

    mu = jnp.mean(x, axis=0, keepdims=True)           # per-channel mean
    d = x - mu
    d2 = d * d
    s = jnp.sum(d2, axis=0, keepdims=True)            # per-channel sum

    denom = 4.0 * (s * (1.0 / n) + e_lambda)          # (1, bc)
    inv = pl.reciprocal(denom)
    y = d2 * inv + 0.5

    o_ref[...] = (x * jax.nn.sigmoid(y)).astype(o_ref.dtype)


def simam(x, e_lambda=1e-4, target_block_bytes=2 * 1024 * 1024):
    """SimAM forward. x: (B, C, H, W). Returns same shape/dtype."""
    b, c, h, w = x.shape
    n = float(h * w - 1)
    rows = b * c
    hw = h * w
    dtype_bytes = jnp.dtype(x.dtype).itemsize

    params = pltpu.CompilerParams(dimension_semantics=("parallel",))

    if hw % 128 == 0:
        # Spatial axis is already lane-dense: (B*C, HW), reduce over lanes.
        x2 = x.reshape(rows, hw)

        br = max(8, (target_block_bytes // (hw * dtype_bytes)) // 8 * 8)
        br = min(br, _round_up(rows, 8))
        grid = (pl.cdiv(rows, br),)
        # Note: a partial last block reads undefined padded rows; rows are
        # independent and out-of-bounds writes are masked, so this is safe.

        kernel = functools.partial(_simam_rows_kernel, n=n, e_lambda=e_lambda)
        out = pl.pallas_call(
            kernel,
            out_shape=jax.ShapeDtypeStruct((rows, hw), x.dtype),
            grid=grid,
            in_specs=[pl.BlockSpec((br, hw), lambda i: (i, 0))],
            out_specs=pl.BlockSpec((br, hw), lambda i: (i, 0)),
            compiler_params=params,
        )(x2)
        return out.reshape(b, c, h, w)

    # Small / odd H*W (e.g. 7x7=49, 14x14=196): put B*C on the lane axis so
    # output stores stay lane-dense; spatial goes on sublanes (full extent).
    x2 = x.reshape(rows, hw).T                        # (HW, B*C)

    bc = max(128, (target_block_bytes // (hw * dtype_bytes)) // 128 * 128)
    bc = min(bc, _round_up(rows, 128))
    grid = (pl.cdiv(rows, bc),)
    # Partial last block: padded channel columns are independent and their
    # writes are masked -> safe.

    kernel = functools.partial(_simam_cols_kernel, n=n, e_lambda=e_lambda)
    out = pl.pallas_call(
        kernel,
        out_shape=jax.ShapeDtypeStruct((hw, rows), x.dtype),
        grid=grid,
        in_specs=[pl.BlockSpec((hw, bc), lambda i: (0, i))],
        out_specs=pl.BlockSpec((hw, bc), lambda i: (0, i)),
        compiler_params=params,
    )(x2)
    return out.T.reshape(b, c, h, w)


def simam_reference(x, e_lambda=1e-4):
    """Pure-JAX reference matching the PyTorch forward exactly."""
    b, c, h, w = x.shape
    n = w * h - 1
    mu = jnp.mean(x, axis=(2, 3), keepdims=True)
    d2 = (x - mu) ** 2
    y = d2 / (4.0 * (jnp.sum(d2, axis=(2, 3), keepdims=True) / n + e_lambda)) + 0.5
    return x * jax.nn.sigmoid(y)


if __name__ == "__main__":
    key = jax.random.PRNGKey(0)

    # Primary case: HW = 256 (multiple of 128) -> lane-axis reduction path.
    x1 = jax.random.normal(key, (2, 4, 16, 16), dtype=jnp.float32)
    out1 = jax.block_until_ready(simam(x1))
    ref1 = simam_reference(x1)
    assert out1.shape == x1.shape and out1.dtype == x1.dtype
    assert jnp.allclose(out1, ref1, atol=1e-5, rtol=1e-5), "mismatch (HW=256)"

    # Odd-spatial case: HW = 49 -> transposed lane-dense path.
    x2 = jax.random.normal(jax.random.PRNGKey(1), (2, 64, 7, 7),
                           dtype=jnp.float32)
    out2 = jax.block_until_ready(simam(x2))
    ref2 = simam_reference(x2)
    assert out2.shape == x2.shape and out2.dtype == x2.dtype
    assert jnp.allclose(out2, ref2, atol=1e-5, rtol=1e-5), "mismatch (HW=49)"

    print("KERNEL_OK")
</pallas_src>

<mosaic_0001>
module attributes {stable_mosaic.version = 11 : i64} {
  func.func @_simam_rows_kernel(%arg0: i32, %arg1: memref<8x256xf32, #tpu.memory_space<vmem>>, %arg2: memref<8x256xf32, #tpu.memory_space<vmem>>) attributes {dimension_semantics = [#tpu.dimension_semantics<parallel>], iteration_bounds = array<i64: 1>, scalar_prefetch = 0 : i64, scratch_operands = 0 : i64, tpu.core_type = #tpu.core_type<tc>, window_params = [{transform_indices = @transform_0, window_bounds = array<i64: 8, 256>}, {transform_indices = @transform_1, window_bounds = array<i64: 8, 256>}]} {
    %c0 = arith.constant 0 : index
    %c0_0 = arith.constant 0 : index
    %0 = vector.load %arg1[%c0, %c0_0] : memref<8x256xf32, #tpu.memory_space<vmem>>, vector<8x256xf32>
    %cst = arith.constant dense<0.000000e+00> : vector<8xf32>
    %1 = vector.multi_reduction <add>, %0, %cst [1] : vector<8x256xf32> to vector<8xf32>
    %2 = vector.shape_cast %1 : vector<8xf32> to vector<8x1xf32>
    %cst_1 = arith.constant 2.560000e+02 : f32
    %3 = vector.broadcast %cst_1 : f32 to vector<8x1xf32>
    %4 = arith.divf %2, %3 : vector<8x1xf32>
    %5 = vector.broadcast %4 : vector<8x1xf32> to vector<8x256xf32>
    %6 = arith.subf %0, %5 : vector<8x256xf32>
    %7 = arith.mulf %6, %6 : vector<8x256xf32>
    %cst_2 = arith.constant dense<0.000000e+00> : vector<8xf32>
    %8 = vector.multi_reduction <add>, %7, %cst_2 [1] : vector<8x256xf32> to vector<8xf32>
    %9 = vector.shape_cast %8 : vector<8xf32> to vector<8x1xf32>
    %cst_3 = arith.constant 0.00392156886 : f32
    %10 = vector.broadcast %cst_3 : f32 to vector<8x1xf32>
    %11 = arith.mulf %9, %10 : vector<8x1xf32>
    %cst_4 = arith.constant 9.99999974E-5 : f32
    %12 = vector.broadcast %cst_4 : f32 to vector<8x1xf32>
    %13 = arith.addf %11, %12 : vector<8x1xf32>
    %cst_5 = arith.constant 4.000000e+00 : f32
    %14 = vector.broadcast %cst_5 : f32 to vector<8x1xf32>
    %15 = arith.mulf %14, %13 : vector<8x1xf32>
    %16 = tpu.reciprocal %15 : vector<8x1xf32> -> vector<8x1xf32>
    %17 = vector.broadcast %16 : vector<8x1xf32> to vector<8x256xf32>
    %18 = arith.mulf %7, %17 : vector<8x256xf32>
    %cst_6 = arith.constant 5.000000e-01 : f32
    %19 = vector.broadcast %cst_6 : f32 to vector<8x256xf32>
    %20 = arith.addf %18, %19 : vector<8x256xf32>
    %21 = arith.negf %20 : vector<8x256xf32>
    %22 = math.exp %21 : vector<8x256xf32>
    %cst_7 = arith.constant 1.000000e+00 : f32
    %23 = vector.broadcast %cst_7 : f32 to vector<8x256xf32>
    %24 = arith.addf %23, %22 : vector<8x256xf32>
    %25 = arith.divf %23, %24 : vector<8x256xf32>
    %26 = arith.mulf %0, %25 : vector<8x256xf32>
    %c0_8 = arith.constant 0 : index
    %c0_9 = arith.constant 0 : index
    %27 = vector.load %arg2[%c0_8, %c0_9] : memref<8x256xf32, #tpu.memory_space<vmem>>, vector<8x256xf32>
    tpu.vector_store %arg2[%c0_8, %c0_9], %26 {strides = array<i32>} : memref<8x256xf32, #tpu.memory_space<vmem>>, vector<8x256xf32>,
    return
  }
  func.func @transform_0(%arg0: i32) -> (i32, i32) {
    %c0_i32 = arith.constant 0 : i32
    %c0_i32_0 = arith.constant 0 : i32
    return %arg0, %c0_i32 : i32, i32
  }
  func.func @transform_1(%arg0: i32) -> (i32, i32) {
    %c0_i32 = arith.constant 0 : i32
    %c0_i32_0 = arith.constant 0 : i32
    return %arg0, %c0_i32 : i32, i32
  }
}

</mosaic_0001>

<llo_original>
// kernel: tpu_custom_call.1
$region0: #{tpu_custom_call.1}
  #allocation0 [shape = 'u32[]', space=smem, size = 0x4, offset = 0x4, fixed_abs, tag = 'smem constant byte address 0x4 - core index']
  #allocation1 [shape = 'u32[144,128]{1,0:T(1,128)}', space=vmem, size = 0x12000, scoped, tag = 'internal scratch']
  %s0 = inlined_call_operand.hbm [shape: f32[8,256], index: 0, kind: input, shape index: {}]
  %s1 = inlined_call_operand.hbm [shape: f32[8,256], index: 1, kind: output, shape index: {}]
  %s2 = sld [smem:[#allocation0]]
  $region18: #{tpu_custom_call.1} parent=0
    _
  %s4 = ssub.s32 1, %s2
  %s5 = scalar_select 0, %s4, %s2
  $region1: #{tpu_custom_call.1} parent=0
    #allocation2 [shape = 'u8[8192]{0}', space=vmem, size = 0x2000, scoped, tag = 'input window, operand 0, single buffered']
    #allocation3 [shape = 's32[1]{0}', space=sflag, size = 0x4, scoped, tag = 'scoped memory for tpu_custom_call.1']
    #allocation4 [shape = 's32[1]{0}', space=sflag, size = 0x4, scoped, tag = 'scoped memory for tpu_custom_call.1']
    #allocation5 [shape = 'u8[8192]{0}', space=vmem, size = 0x2000, scoped, tag = 'output window, operand 0, single buffered']
    %6 = vsyncpa [#allocation3], 0
    %7 = vsyncpa [#allocation4], 0
    // Predicated region
    $region2: #{tpu_custom_call.1} parent=1 // pred_check
      _
    $region3: #{tpu_custom_call.1} parent=1 // pred_check_branch
      %9 = sbr.rel (0) target = $region5
    $region4: #{tpu_custom_call.1} parent=1 // pred_region
      %s11 = ssub.s32 256, 256
      %12 = vsyncadd [#allocation3], %s11
      %s14 = sshll.u32 [#allocation2], 4
      %s15 = int_to_ptr.vmem [resolvable:$true] %s14
      %17 = dma.hbm_to_vmem [thread:$0]  %s0, 256, %s15, [#allocation3]
    $region5: #{tpu_custom_call.1} parent=1 // pred_fallthru
      _
    // Predicated region
    $region6: #{tpu_custom_call.1} parent=1 // pred_check
      _
    $region7: #{tpu_custom_call.1} parent=1 // pred_check_branch
      %19 = sbr.rel (0) target = $region9
    $region8: #{tpu_custom_call.1} parent=1 // pred_region
      %20 = dma.done [#allocation3], 256
    $region9: #{tpu_custom_call.1} parent=1 // pred_fallthru
      _
    %v21 = vld [vmem:[#allocation2] sm:$0xff]
    %v22 = vld [vmem:[#allocation2 + $0x8] sm:$0xff]
    %v23 = vadd.f32 %v21, %v22
    %24 = vadd.xlane.f32.xlu0 %v23
    %v25 = vpop.xlane.xlu0 %24
    %v26 = vrcp.pop 256.0
    %v27 = vmul.f32 %v25, %v26
    %v28 = vsub.f32 %v21, %v27
    %v29 = vsub.f32 %v22, %v27
    %v30 = vmul.f32 %v28, %v28
    %v31 = vmul.f32 %v29, %v29
    %v32 = vadd.f32 %v30, %v31
    %33 = vadd.xlane.f32.xlu0 %v32
    %v34 = vpop.xlane.xlu0 %33
    %v35 = vmul.f32 %v34, 0.003921569
    %v36 = vadd.f32 %v35, 0.0001
    %v37 = vmul.f32 %v36, 4.0
    %v38 = vrcp.pop %v37
    %v39 = vmul.f32 %v30, %v38
    %v40 = vmul.f32 %v31, %v38
    %v41 = vadd.f32 %v39, 0.5
    %v42 = vadd.f32 %v40, 0.5
    %v43 = vxor.u32 %v41, 2147483648
    %v44 = vxor.u32 %v42, 2147483648
    %v45 = vmul.f32 %v43, 1.442695
    %v46 = vpow.pop %v45
    %v47 = vmul.f32 %v44, 1.442695
    %v48 = vpow.pop %v47
    %v49 = vadd.f32 %v46, 1.0
    %v50 = vadd.f32 %v48, 1.0
    %v51 = vrcp.pop %v49
    %v52 = vmul.f32 1.0, %v51
    %v53 = vrcp.pop %v50
    %v54 = vmul.f32 1.0, %v53
    %v55 = vmul.f32 %v21, %v52
    %v56 = vmul.f32 %v22, %v54
    %57 = vst [vmem:[#allocation5] sm:$0xff] %v55
    %58 = vst [vmem:[#allocation5 + $0x8] sm:$0xff] %v56
    // Predicated region
    $region10: #{tpu_custom_call.1} parent=1 // pred_check
      _
    $region11: #{tpu_custom_call.1} parent=1 // pred_check_branch
      %60 = sbr.rel (0) target = $region13
    $region12: #{tpu_custom_call.1} parent=1 // pred_region
      %s62 = ssub.s32 256, 256
      %63 = vsyncadd [#allocation4], %s62
      %s65 = sshll.u32 [#allocation5], 4
      %s66 = int_to_ptr.vmem [resolvable:$true] %s65
      %68 = dma.vmem_to_hbm [thread:$0]  %s66, 256, %s1, [#allocation4]
    $region13: #{tpu_custom_call.1} parent=1 // pred_fallthru
      _
    // Predicated region
    $region14: #{tpu_custom_call.1} parent=1 // pred_check
      _
    $region15: #{tpu_custom_call.1} parent=1 // pred_check_branch
      %70 = sbr.rel (0) target = $region17
    $region16: #{tpu_custom_call.1} parent=1 // pred_region
      %71 = dma.done [#allocation4], 256
    $region17: #{tpu_custom_call.1} parent=1 // pred_fallthru
      _
    %72 = vsyncpa [#allocation3], 1
    %73 = vsyncpa [#allocation4], 1

</llo_original>
